<compile_context>
chip_gen: v5e
topology: v5e:2x2
jax: 0.10.0
libtpu: 0.0.40
codegen_flags: <defaults>
</compile_context>

<pallas_src>
import jax
import jax.numpy as jnp
from jax.experimental import pallas as pl
from jax.experimental.pallas import tpu as pltpu

_LANES = 128
_SUBLANES = 8
_ROW_QUANTA = _SUBLANES * _LANES  # 1024 elements


def _make_sine_kernel(w0):
    w0_f32 = float(w0)

    def kernel(x_ref, o_ref):
        # Compute in f32 (accurate range reduction even for bf16 I/O),
        # cast back to the output dtype on store.
        x = x_ref[...].astype(jnp.float32)
        o_ref[...] = jnp.sin(w0_f32 * x).astype(o_ref.dtype)

    return kernel


def _choose_tile_rows(rows, tile_rows):
    """Pick a row tile: multiple of 8, <= tile_rows, >= 2 grid steps if possible."""
    if rows <= tile_rows:
        if rows >= 2 * _SUBLANES:
            # Split the work into at least 2 blocks so both v7x TensorCores
            # are used on mid-sized inputs.
            half = -(-rows // 2)
            tr = ((half + _SUBLANES - 1) // _SUBLANES) * _SUBLANES
        else:
            tr = rows
    else:
        tr = tile_rows
    return tr


def sine(x, w0=1.0, *, tile_rows=4096):
    """Elementwise sin(w0 * x) for any float input shape/dtype."""
    orig_shape = x.shape
    orig_dtype = x.dtype
    itemsize = jnp.dtype(orig_dtype).itemsize

    flat = x.reshape(-1)
    n = flat.shape[0]

    # Pad only when needed (common SIREN feature-map sizes are multiples of 1024).
    n_pad = ((n + _ROW_QUANTA - 1) // _ROW_QUANTA) * _ROW_QUANTA
    padded = n_pad != n
    if padded:
        flat = jnp.pad(flat, (0, n_pad - n))

    rows = n_pad // _LANES            # always a multiple of 8
    x2d = flat.reshape(rows, _LANES)  # lane-dense slab

    tr = _choose_tile_rows(rows, tile_rows)
    grid = (pl.cdiv(rows, tr),)

    out2d = pl.pallas_call(
        _make_sine_kernel(w0),
        out_shape=jax.ShapeDtypeStruct((rows, _LANES), x2d.dtype),
        grid_spec=pl.GridSpec(
            grid=grid,
            in_specs=[pl.BlockSpec((tr, _LANES), lambda i: (i, 0))],
            out_specs=pl.BlockSpec((tr, _LANES), lambda i: (i, 0)),
        ),
        compiler_params=pltpu.CompilerParams(
            dimension_semantics=("parallel",),
        ),
        cost_estimate=pl.CostEstimate(
            flops=n_pad,
            transcendentals=n_pad,
            bytes_accessed=2 * n_pad * itemsize,
        ),
    )(x2d)

    if padded:
        out = out2d.reshape(-1)[:n].reshape(orig_shape)
    else:
        out = out2d.reshape(orig_shape)
    return out


if __name__ == "__main__":
    key = jax.random.PRNGKey(0)

    # Case 1: small NCHW input, element count already a multiple of 1024
    # (no wrapper pad/slice), as used inside SIREN nets.
    x = jax.random.normal(key, (2, 4, 16, 16), dtype=jnp.float32)
    w0 = 30.0  # typical SIREN first-layer frequency; module default is 1.0
    y = jax.block_until_ready(sine(x, w0=w0))
    ref = jnp.sin(w0 * x)
    assert y.shape == x.shape and y.dtype == x.dtype
    assert jnp.max(jnp.abs(y - ref)) < 1e-5

    # Case 2: ragged element count (exercises the padded path).
    k2 = jax.random.PRNGKey(1)
    x2 = jax.random.normal(k2, (3, 5, 7, 11), dtype=jnp.float32)
    y2 = jax.block_until_ready(sine(x2, w0=1.0))
    ref2 = jnp.sin(1.0 * x2)
    assert y2.shape == x2.shape and y2.dtype == x2.dtype
    assert jnp.max(jnp.abs(y2 - ref2)) < 1e-5

    # Case 3: bf16 I/O (compute still in f32 inside the kernel).
    x3 = jax.random.normal(jax.random.PRNGKey(2), (2, 4, 16, 16)).astype(jnp.bfloat16)
    y3 = jax.block_until_ready(sine(x3, w0=w0))
    ref3 = jnp.sin(w0 * x3.astype(jnp.float32)).astype(jnp.bfloat16)
    assert y3.shape == x3.shape and y3.dtype == x3.dtype
    assert jnp.max(jnp.abs(y3.astype(jnp.float32) - ref3.astype(jnp.float32))) < 2e-2

    print("KERNEL_OK")
</pallas_src>

<mosaic_0001>
module attributes {stable_mosaic.version = 11 : i64} {
  func.func @kernel(%arg0: i32, %arg1: memref<8x128xf32, #tpu.memory_space<vmem>>, %arg2: memref<8x128xf32, #tpu.memory_space<vmem>>) attributes {dimension_semantics = [#tpu.dimension_semantics<parallel>], iteration_bounds = array<i64: 2>, scalar_prefetch = 0 : i64, scratch_operands = 0 : i64, tpu.core_type = #tpu.core_type<tc>, window_params = [{transform_indices = @transform_0, window_bounds = array<i64: 8, 128>}, {transform_indices = @transform_1, window_bounds = array<i64: 8, 128>}]} {
    %c0 = arith.constant 0 : index
    %c0_0 = arith.constant 0 : index
    %0 = vector.load %arg1[%c0, %c0_0] : memref<8x128xf32, #tpu.memory_space<vmem>>, vector<8x128xf32>
    %cst = arith.constant 3.000000e+01 : f32
    %1 = vector.broadcast %cst : f32 to vector<8x128xf32>
    %2 = arith.mulf %1, %0 : vector<8x128xf32>
    %3 = math.sin %2 : vector<8x128xf32>
    %c0_1 = arith.constant 0 : index
    %c0_2 = arith.constant 0 : index
    %4 = vector.load %arg2[%c0_1, %c0_2] : memref<8x128xf32, #tpu.memory_space<vmem>>, vector<8x128xf32>
    tpu.vector_store %arg2[%c0_1, %c0_2], %3 {strides = array<i32>} : memref<8x128xf32, #tpu.memory_space<vmem>>, vector<8x128xf32>,
    return
  }
  func.func @transform_0(%arg0: i32) -> (i32, i32) {
    %c0_i32 = arith.constant 0 : i32
    %c0_i32_0 = arith.constant 0 : i32
    return %arg0, %c0_i32 : i32, i32
  }
  func.func @transform_1(%arg0: i32) -> (i32, i32) {
    %c0_i32 = arith.constant 0 : i32
    %c0_i32_0 = arith.constant 0 : i32
    return %arg0, %c0_i32 : i32, i32
  }
}

</mosaic_0001>

<llo_original>
// kernel: tpu_custom_call.1
$region0: #{tpu_custom_call.1}
  #allocation0 [shape = 'u32[]', space=smem, size = 0x4, offset = 0x4, fixed_abs, tag = 'smem constant byte address 0x4 - core index']
  #allocation1 [shape = 'u32[72,128]{1,0:T(1,128)}', space=vmem, size = 0x9000, scoped, tag = 'internal scratch']
  %s0 = inlined_call_operand.hbm [shape: f32[16,128], index: 0, kind: input, shape index: {}]
  %s1 = inlined_call_operand.hbm [shape: f32[16,128], index: 1, kind: output, shape index: {}]
  %s2 = sld [smem:[#allocation0]]
  $region41: #{tpu_custom_call.1} parent=0
    _
  %s4 = ssub.s32 1, %s2
  %s5 = scalar_select 0, %s4, %s2
  $region1: #{tpu_custom_call.1} parent=0
    #allocation2 [shape = 'u8[8192]{0}', space=vmem, size = 0x2000, scoped, tag = 'input window, operand 0']
    #allocation3 [shape = 's32[2]{0}', space=sflag, size = 0x8, scoped, tag = 'scoped memory for tpu_custom_call.1']
    #allocation4 [shape = 's32[2]{0}', space=sflag, size = 0x8, scoped, tag = 'scoped memory for tpu_custom_call.1']
    #allocation5 [shape = 'u8[8192]{0}', space=vmem, size = 0x2000, scoped, tag = 'output window, operand 0']
    %6 = vsyncpa [#allocation3], 0
    %s7 = scalar_lea.sflag [#allocation3], 1
    %8 = vsyncpa %s7, 0
    %9 = vsyncpa [#allocation4], 0
    %s10 = scalar_lea.sflag [#allocation4], 1
    %11 = vsyncpa %s10, 0
    loop: start=0, step=1, limit=4
    $region2: #{tpu_custom_call.1} parent=1 // loop_pre_header
      _
    $region3: #{tpu_custom_call.1} parent=1 // loop_header
      %s13 = sphi 0, %s17
      %p14 = scmp.ge.s32.totalorder %s13, 4
      %s23 = sphi 0, %s25
      %s26 = sphi 0, %s23
      %s27 = sphi 0, %s26
      %s43 = sphi 0, %s27
      %s49 = sphi 0, %s51
      %s52 = sphi 0, %s49
      %s53 = sphi 0, %s52
      %s69 = sphi 0, %s53
    $region4: #{tpu_custom_call.1} parent=1 // loop_header_branch
      %16 = sbr.rel (%p14) target = $region8
    $region5: #{tpu_custom_call.1} parent=1 // loop_body
      %s18 = ssub.s32 %s13, 1
      %s19 = ssub.s32 %s13, 2
      %s20 = sadd.s32 %s13, 1
      %s21 = ssub.s32 %s13, %s20
      %p22 = scmp.eq.s32.totalorder %s21, 0
      %s24 = sadd.s32 %s23, 1
      %s25 = scalar_select %p22, %s23, %s24
      %p28 = pneg %p22
      %p29 = scmp.eq.s32.totalorder %s13, 1
      %p30 = por %p28, %p29
      %p31 = scmp.ne.s32.totalorder %s23, %s26
      %p32 = scmp.eq.s32.totalorder %s13, 0
      %p33 = por %p31, %p32
      %p34 = scmp.ne.s32.totalorder %s23, %s26
      %p35 = scmp.eq.s32.totalorder %s18, 1
      %p36 = por %p34, %p35
      %p37 = scmp.ne.s32.totalorder %s26, %s27
      %p38 = scmp.eq.s32.totalorder %s18, 0
      %p39 = por %p37, %p38
      %p40 = scmp.ne.s32.totalorder %s26, %s27
      %p41 = scmp.eq.s32.totalorder %s19, 1
      %p42 = por %p40, %p41
      %p44 = scmp.ne.s32.totalorder %s27, %s43
      %p45 = scmp.eq.s32.totalorder %s19, 0
      %p46 = por %p44, %p45
      %s47 = ssub.s32 %s13, %s20
      %p48 = scmp.eq.s32.totalorder %s47, 0
      %s50 = sadd.s32 %s49, 1
      %s51 = scalar_select %p48, %s49, %s50
      %p54 = pneg %p48
      %p55 = scmp.eq.s32.totalorder %s13, 1
      %p56 = por %p54, %p55
      %p57 = scmp.ne.s32.totalorder %s49, %s52
      %p58 = scmp.eq.s32.totalorder %s13, 0
      %p59 = por %p57, %p58
      %p60 = scmp.ne.s32.totalorder %s49, %s52
      %p61 = scmp.eq.s32.totalorder %s18, 1
      %p62 = por %p60, %p61
      %p63 = scmp.ne.s32.totalorder %s52, %s53
      %p64 = scmp.eq.s32.totalorder %s18, 0
      %p65 = por %p63, %p64
      %p66 = scmp.ne.s32.totalorder %s52, %s53
      %p67 = scmp.eq.s32.totalorder %s19, 1
      %p68 = por %p66, %p67
      %p70 = scmp.ne.s32.totalorder %s53, %s69
      %p71 = scmp.eq.s32.totalorder %s19, 0
      %p72 = por %p70, %p71
      %p73 = scmp.le.s32.totalorder 1, %s13
      %p74 = scmp.lt.s32.totalorder %s13, 3
      %p75 = pnand %p73, %p74
      %p76 = pneg %p75
      // Predicated region
      $region9: #{tpu_custom_call.1} parent=5 // pred_check
        _
      $region10: #{tpu_custom_call.1} parent=5 // pred_check_branch
        %78 = sbr.rel (%p75) target = $region12
      $region11: #{tpu_custom_call.1} parent=5 // pred_region
        %s79 = ssub.s32 %s13, 1
      $region12: #{tpu_custom_call.1} parent=5 // pred_fallthru
        _
      %p80 = scmp.lt.s32.totalorder %s13, 2
      // Predicated region
      $region13: #{tpu_custom_call.1} parent=5 // pred_check
        %p81 = pneg %p80
      $region14: #{tpu_custom_call.1} parent=5 // pred_check_branch
        %83 = sbr.rel (%p81) target = $region16
      $region15: #{tpu_custom_call.1} parent=5 // pred_region
        // Predicated region
        $region17: #{tpu_custom_call.1} parent=15 // pred_check
          %p84 = pneg %p33
        $region18: #{tpu_custom_call.1} parent=15 // pred_check_branch
          %86 = sbr.rel (%p84) target = $region20
        $region19: #{tpu_custom_call.1} parent=15 // pred_region
          %s87 = sand.u32 %s23, 1
          %s88 = scalar_lea.sflag [#allocation3], %s87
          %s89 = sand.u32 %s23, 1
          %s90 = smul.addr %s89, 8
          %s91 = scalar_lea.vmem [#allocation2], %s90
          %93 = vsyncadd %s88, 0
          %s94 = smul.addr %s13, 8
          %s95 = scalar_lea.hbm %s0, %s94
          %s97 = sshll.u32 %s95, 4
          %s98 = int_to_ptr.hbm [resolvable:$true] %s97
          %s99 = sshll.u32 %s91, 4
          %s100 = int_to_ptr.vmem [resolvable:$true] %s99
          %102 = dma.hbm_to_vmem [thread:$0]  %s98, 128, %s100, %s88
        $region20: #{tpu_custom_call.1} parent=15 // pred_fallthru
          _
      $region16: #{tpu_custom_call.1} parent=5 // pred_fallthru
        _
      %p103 = scmp.le.s32.totalorder 1, %s13
      %p104 = scmp.lt.s32.totalorder %s13, 3
      %p105 = pnand %p103, %p104
      %p106 = pneg %p105
      // Predicated region
      $region21: #{tpu_custom_call.1} parent=5 // pred_check
        _
      $region22: #{tpu_custom_call.1} parent=5 // pred_check_branch
        %108 = sbr.rel (%p105) target = $region24
      $region23: #{tpu_custom_call.1} parent=5 // pred_region
        %s109 = ssub.s32 %s13, 1
        %s110 = sand.u32 %s26, 1
        %s111 = scalar_lea.sflag [#allocation3], %s110
        %s112 = sand.u32 %s26, 1
        %s113 = smul.addr %s112, 8
        %s114 = scalar_lea.vmem [#allocation2], %s113
        // Predicated region
        $region25: #{tpu_custom_call.1} parent=23 // pred_check
          %p115 = pneg %p39
        $region26: #{tpu_custom_call.1} parent=23 // pred_check_branch
          %117 = sbr.rel (%p115) target = $region28
        $region27: #{tpu_custom_call.1} parent=23 // pred_region
          %119 = dma.done %s111, 128
        $region28: #{tpu_custom_call.1} parent=23 // pred_fallthru
          _
        %s120 = sand.u32 %s26, 1
        %s121 = scalar_lea.sflag [#allocation3], %s120
        %s122 = sand.u32 %s26, 1
        %s123 = smul.addr %s122, 8
        %s124 = scalar_lea.vmem [#allocation2], %s123
        %p125 = pneg %p39
        %p126 = pneg %p36
        %p127 = pneg %p65
        %p128 = pneg %p62
        %s129 = sand.u32 %s52, 1
        %s130 = scalar_lea.sflag [#allocation4], %s129
        %s131 = sand.u32 %s52, 1
        %s132 = smul.addr %s131, 8
        %s133 = scalar_lea.vmem [#allocation5], %s132
        %v134 = vld [vmem:[%s114] sm:$0xff]
        %v135 = vmul.f32 %v134, 30.0
        %v136 = vand.u32 2147483647, %v135
        %vm137 = vcmp.le.f32.partialorder %v136, 0.7853982
        %vm138 = vcmp.lt.s32.totalorder %v135, 0
        %v139 = vand.u32 %v135, 2139095040
        %v140 = vshrl.u32 %v139, 23
        %v141 = vsub.s32 %v140, 127
        %v142 = vand.u32 2147483647, %v135
        %v143 = vand.u32 %v142, 8388607
        %v144 = vor.u32 %v143, 8388608
        %v145 = vsub.s32 0, %v144
        %v146 = vadd.s32 %v141, 1
        %vm147 = vcmp.gt.s32.totalorder %v146, 0
        %v148 = vsel %vm147, %v146, 0
        %v149 = vshrl.u32 %v148, 5
        %v150 = vand.u32 %v148, 31
        %v151 = vsub.s32 32, %v150
        %v152 = vshrl.u32 683565275, %v151
        %v153 = vshll.u32 683565275, %v150
        %v154 = vshrl.u32 2475754826, %v151
        %v155 = vor.u32 %v153, %v154
        %v156 = vshll.u32 2475754826, %v150
        %v157 = vshrl.u32 2131351028, %v151
        %v158 = vor.u32 %v156, %v157
        %v159 = vshll.u32 2131351028, %v150
        %v160 = vshrl.u32 2102212464, %v151
        %v161 = vor.u32 %v159, %v160
        %v162 = vshll.u32 2102212464, %v150
        %v163 = vshrl.u32 920167782, %v151
        %v164 = vor.u32 %v162, %v163
        %v165 = vshll.u32 920167782, %v150
        %v166 = vshrl.u32 1326507024, %v151
        %v167 = vor.u32 %v165, %v166
        %vm168 = vcmp.lt.s32.totalorder %v149, 1
        %vm169 = vcmp.lt.s32.totalorder %v149, 2
        %vm170 = vcmp.lt.s32.totalorder %v149, 3
        %vm171 = vcmp.lt.s32.totalorder %v149, 4
        %v172 = vsel %vm168, %v152, %v155
        %v173 = vsel %vm171, %v161, 2102212464
        %v174 = vsel %vm170, %v158, %v173
        %v175 = vsel %vm169, %v172, %v174
        %v176 = vsel %vm168, %v155, %v158
        %v177 = vsel %vm171, %v164, 920167782
        %v178 = vsel %vm170, %v161, %v177
        %v179 = vsel %vm169, %v176, %v178
        %v180 = vsel %vm168, %v158, %v161
        %v181 = vsel %vm171, %v167, 1326507024
        %v182 = vsel %vm170, %v164, %v181
        %v183 = vsel %vm169, %v180, %v182
        %v184 = vshll.u32 %v144, 8
        %v185 = vand.u32 %v184, 65535
        %v186 = vshrl.u32 %v184, 16
        %v187 = vand.u32 %v183, 65535
        %v188 = vshrl.u32 %v183, 16
        %v189 = vmul.u32 %v185, %v187
        %v190 = vmul.u32 %v185, %v188
        %v191 = vmul.u32 %v186, %v187
        %v192 = vmul.u32 %v186, %v188
        %v193 = vshll.u32 %v190, 16
        %v194 = vshrl.u32 %v190, 16
        %v195 = vshll.u32 %v191, 16
        %v196 = vshrl.u32 %v191, 16
        %vm197 = vc.u32 %v189, %v193
        %v198 = vsel %vm197, 1, 0
        %v199 = vadd.s32 %v189, %v193
        %v200 = vadd.s32 %v192, %v198
        %vm201 = vc.u32 %v199, %v195
        %v202 = vsel %vm201, 1, 0
        %v203 = vadd.s32 %v199, %v195
        %v204 = vadd.s32 %v200, %v202
        %v205 = vadd.s32 %v204, %v194
        %v206 = vadd.s32 %v205, %v196
        %v207 = vand.u32 %v184, 65535
        %v208 = vshrl.u32 %v184, 16
        %v209 = vand.u32 %v179, 65535
        %v210 = vshrl.u32 %v179, 16
        %v211 = vmul.u32 %v207, %v209
        %v212 = vmul.u32 %v207, %v210
        %v213 = vmul.u32 %v208, %v209
        %v214 = vmul.u32 %v208, %v210
        %v215 = vshll.u32 %v212, 16
        %v216 = vshrl.u32 %v212, 16
        %v217 = vshll.u32 %v213, 16
        %v218 = vshrl.u32 %v213, 16
        %vm219 = vc.u32 %v211, %v215
        %v220 = vsel %vm219, 1, 0
        %v221 = vadd.s32 %v211, %v215
        %v222 = vadd.s32 %v214, %v220
        %vm223 = vc.u32 %v221, %v217
        %v224 = vsel %vm223, 1, 0
        %v225 = vadd.s32 %v221, %v217
        %v226 = vadd.s32 %v222, %v224
        %v227 = vadd.s32 %v226, %v216
        %v228 = vadd.s32 %v227, %v218
        %v229 = vmul.u32 %v184, %v175
        %v230 = vadd.s32 %v206, %v225
        %vm231 = vc.u32 %v206, %v225
        %v232 = vadd.s32 %v228, 1
        %v233 = vsel %vm231, %v232, %v228
        %v234 = vadd.s32 %v229, %v233
        %v235 = vadd.s32 %v234, 536870912
        %v236 = vshrl.u32 %v235, 30
        %v237 = vshll.u32 %v236, 30
        %v238 = vsub.s32 %v234, %v237
        %vm239 = vcmp.lt.s32.totalorder %v238, 0
        %v240 = vsub.s32 0, %v238
        %v241 = vsel %vm239, %v240, %v238
        %v242 = vclz %v241
        %v243 = vsub.s32 %v242, 2
        %vm244 = vcmp.gt.s32.totalorder 0, %v243
        %v245 = vsel %vm244, 0, %v243
        %v246 = vsub.s32 32, %v245
        %v247 = vshll.u32 %v238, %v245
        %v248 = vshrl.u32 %v230, %v246
        %v249 = vor.u32 %v247, %v248
        %v250 = vsub.s32 4294967266, %v245
        %v251 = vadd.s32 %v250, 127
        %v252 = vshll.u32 %v251, 23
        %v253 = vor.u32 4788187, %v252
        %v254 = vand.u32 2147483647, %v253
        %v256 = vcvt.s32.f32 %v249
        %v257 = vmul.f32 %v256, %v254
        %v258 = vxor.u32 %v257, 2147483648
        %v259 = vsel %vm138, %v258, %v257
        %v260 = vsub.s32 4, %v236
        %v261 = vsel %vm138, %v260, %v236
        %v262 = vsel %vm137, %v135, %v259
        %v263 = vsel %vm137, 0, %v261
        %v264 = vmul.f32 %v262, %v262
        %v265 = vmul.f32 %v264, -0.001358992
        %v266 = vadd.f32 %v265, 0.041655596
        %v267 = vmul.f32 %v264, %v266
        %v268 = vadd.f32 %v267, -0.4999988
        %v269 = vmul.f32 %v264, %v268
        %v270 = vadd.f32 1.0, %v269
        %v271 = vmul.f32 %v262, %v262
        %v272 = vmul.f32 %v271, -0.00019511016
        %v273 = vadd.f32 %v272, 0.008332121
        %v274 = vmul.f32 %v271, %v273
        %v275 = vadd.f32 %v274, -0.16666654
        %v276 = vmul.f32 %v271, %v275
        %v277 = vadd.f32 %v276, 1.0
        %v278 = vmul.f32 %v277, %v262
        %vm279 = vweird.f32 %v135
        %v280 = vadd.s32 %v263, 3
        %v281 = vand.u32 %v280, 3
        %vm282 = vcmp.lt.s32.totalorder %v281, 2
        %vm283 = vcmp.eq.s32.totalorder %v281, 0
        %v284 = vxor.u32 %v278, 2147483648
        %v285 = vsel %vm283, %v270, %v284
        %vm286 = vcmp.eq.s32.totalorder %v281, 2
        %v287 = vxor.u32 %v270, 2147483648
        %v288 = vsel %vm286, %v287, %v278
        %v289 = vsel %vm282, %v285, %v288
        %v290 = vsel %vm279, nan, %v289
        %291 = vst [vmem:[%s133] sm:$0xff] %v290
        %s292 = sand.u32 %s52, 1
        %s293 = scalar_lea.sflag [#allocation4], %s292
        %s294 = sand.u32 %s52, 1
        %s295 = smul.addr %s294, 8
        %s296 = scalar_lea.vmem [#allocation5], %s295
        // Predicated region
        $region29: #{tpu_custom_call.1} parent=23 // pred_check
          %p297 = pneg %p62
        $region30: #{tpu_custom_call.1} parent=23 // pred_check_branch
          %299 = sbr.rel (%p297) target = $region32
        $region31: #{tpu_custom_call.1} parent=23 // pred_region
          %301 = vsyncadd %s293, 0
          %s302 = smul.addr %s18, 8
          %s303 = scalar_lea.hbm %s1, %s302
          %s305 = sshll.u32 %s296, 4
          %s306 = int_to_ptr.vmem [resolvable:$true] %s305
          %s307 = sshll.u32 %s303, 4
          %s308 = int_to_ptr.hbm [resolvable:$true] %s307
          %310 = dma.vmem_to_hbm [thread:$0]  %s306, 128, %s308, %s293
        $region32: #{tpu_custom_call.1} parent=23 // pred_fallthru
          _
      $region24: #{tpu_custom_call.1} parent=5 // pred_fallthru
        _
      %p311 = scmp.le.s32.totalorder 2, %s13
      // Predicated region
      $region33: #{tpu_custom_call.1} parent=5 // pred_check
        %p312 = pneg %p311
      $region34: #{tpu_custom_call.1} parent=5 // pred_check_branch
        %314 = sbr.rel (%p312) target = $region36
      $region35: #{tpu_custom_call.1} parent=5 // pred_region
        %s315 = ssub.s32 %s13, 2
        // Predicated region
        $region37: #{tpu_custom_call.1} parent=35 // pred_check
          %p316 = pneg %p68
        $region38: #{tpu_custom_call.1} parent=35 // pred_check_branch
          %318 = sbr.rel (%p316) target = $region40
        $region39: #{tpu_custom_call.1} parent=35 // pred_region
          %s319 = sand.u32 %s53, 1
          %s320 = scalar_lea.sflag [#allocation4], %s319
          %s321 = sand.u32 %s53, 1
          %s322 = smul.addr %s321, 8
          %s323 = scalar_lea.vmem [#allocation5], %s322
          %325 = dma.done %s320, 128
        $region40: #{tpu_custom_call.1} parent=35 // pred_fallthru
          _
      $region36: #{tpu_custom_call.1} parent=5 // pred_fallthru
        _
    $region6: #{tpu_custom_call.1} parent=1 // loop_footer
      %s17 = sadd.s32 1, %s13
    $region7: #{tpu_custom_call.1} parent=1 // loop_footer_branch
      %12 = sbr.rel target = $region3
    $region8: #{tpu_custom_call.1} parent=1 // loop_exit
      _
    %326 = vsyncpa [#allocation3], 1
    %s327 = scalar_lea.sflag [#allocation3], 1
    %328 = vsyncpa %s327, 1
    %329 = vsyncpa [#allocation4], 1
    %s330 = scalar_lea.sflag [#allocation4], 1
    %331 = vsyncpa %s330, 1

</llo_original>
